<compile_context>
chip_gen: v7x
topology: tpu7x:2x2x1
jax: 0.10.0
libtpu: 0.0.40
codegen_flags: <defaults>
</compile_context>

<pallas_src>
import math

import jax
import jax.numpy as jnp
from jax.experimental import pallas as pl
from jax.experimental.pallas import tpu as pltpu

MIN_VALUE = -1.0
MAX_VALUE = 1.0
_SCALE = 255.0 / (MAX_VALUE - MIN_VALUE)   # 127.5
_BIAS = 0.5 - MIN_VALUE * _SCALE           # 128.0  (folds (x - min)*scale + 0.5)

_LANES = 128
_TILE_ROWS = 1024  # 1024 x 128 f32 = 512 KiB/tile; multiple of 8 for (8,128) tiling


def _postproc_kernel(x_ref, o_ref):
    # Cast in-kernel (handles bf16/fp16 inputs without a wrapper HBM pass),
    # single multiply-add + clamp on the VPU.
    x = x_ref[...].astype(jnp.float32)
    o_ref[...] = jnp.clip(x * _SCALE + _BIAS, 0.0, 255.0)


def _run_2d(x2d):
    rows, lanes = x2d.shape
    if rows <= _TILE_ROWS:
        tile_rows = rows               # block == full array dims (always legal)
        grid = (1,)
    else:
        tile_rows = _TILE_ROWS         # multiple of 8; Pallas masks partial last block
        grid = (pl.cdiv(rows, tile_rows),)

    return pl.pallas_call(
        _postproc_kernel,
        out_shape=jax.ShapeDtypeStruct((rows, lanes), jnp.float32),
        grid_spec=pltpu.PrefetchScalarGridSpec(
            num_scalar_prefetch=0,
            grid=grid,
            in_specs=[pl.BlockSpec((tile_rows, lanes), lambda i: (i, 0))],
            out_specs=pl.BlockSpec((tile_rows, lanes), lambda i: (i, 0)),
        ),
        compiler_params=pltpu.CompilerParams(
            dimension_semantics=("parallel",),   # shards grid across TCs on v7x
        ),
    )(x2d)


def post_synthesis_processing(synthesized_image: jax.Array) -> jax.Array:
    """clamp((x - min) * 255/(max - min) + 0.5, 0, 255); returns float32."""
    orig_shape = synthesized_image.shape
    n = int(math.prod(orig_shape))

    if n % _LANES == 0:
        # Free lane-dense view: exactly 1 HBM read + 1 HBM write total.
        rows = n // _LANES
        out2d = _run_2d(synthesized_image.reshape(rows, _LANES))
        return out2d.reshape(orig_shape)

    # Rare fallback: element count not a multiple of 128 -> pad the flat tail.
    n_pad = ((n + _LANES - 1) // _LANES) * _LANES
    flat = jnp.pad(synthesized_image.reshape(-1), (0, n_pad - n))
    out2d = _run_2d(flat.reshape(n_pad // _LANES, _LANES))
    return out2d.reshape(-1)[:n].reshape(orig_shape)


def _reference(x):
    # Mirrors the PyTorch module (float32 output via promotion).
    y = (x.astype(jnp.float32) - MIN_VALUE) * 255.0 / (MAX_VALUE - MIN_VALUE)
    return jnp.clip(y + 0.5, 0.0, 255.0)


if __name__ == "__main__":
    key = jax.random.PRNGKey(0)
    # NCHW, values roughly in [-1, 1] like a StyleGAN synthesis output.
    x = jax.random.uniform(key, (2, 4, 16, 16), dtype=jnp.float32,
                           minval=-1.5, maxval=1.5)

    out = jax.block_until_ready(post_synthesis_processing(x))

    ref = _reference(x)
    assert out.shape == x.shape
    assert out.dtype == jnp.float32
    assert jnp.allclose(out, ref, atol=1e-3, rtol=1e-5), "mismatch vs reference"
    print("KERNEL_OK")
</pallas_src>

<mosaic_0001>
module attributes {stable_mosaic.version = 11 : i64} {
  func.func @_postproc_kernel(%arg0: i32, %arg1: memref<16x128xf32, #tpu.memory_space<vmem>>, %arg2: memref<16x128xf32, #tpu.memory_space<vmem>>) attributes {dimension_semantics = [#tpu.dimension_semantics<parallel>], iteration_bounds = array<i64: 1>, scalar_prefetch = 0 : i64, scratch_operands = 0 : i64, tpu.core_type = #tpu.core_type<tc>, window_params = [{transform_indices = @transform_0, window_bounds = array<i64: 16, 128>}, {transform_indices = @transform_1, window_bounds = array<i64: 16, 128>}]} {
    %c0 = arith.constant 0 : index
    %c0_0 = arith.constant 0 : index
    %0 = vector.load %arg1[%c0, %c0_0] : memref<16x128xf32, #tpu.memory_space<vmem>>, vector<16x128xf32>
    %cst = arith.constant 1.275000e+02 : f32
    %1 = vector.broadcast %cst : f32 to vector<16x128xf32>
    %2 = arith.mulf %0, %1 : vector<16x128xf32>
    %cst_1 = arith.constant 1.280000e+02 : f32
    %3 = vector.broadcast %cst_1 : f32 to vector<16x128xf32>
    %4 = arith.addf %2, %3 : vector<16x128xf32>
    %cst_2 = arith.constant 0.000000e+00 : f32
    %cst_3 = arith.constant 2.550000e+02 : f32
    %5 = vector.broadcast %cst_2 : f32 to vector<16x128xf32>
    %6 = arith.maximumf %5, %4 : vector<16x128xf32>
    %7 = vector.broadcast %cst_3 : f32 to vector<16x128xf32>
    %8 = arith.minimumf %7, %6 : vector<16x128xf32>
    %c0_4 = arith.constant 0 : index
    %c0_5 = arith.constant 0 : index
    %9 = vector.load %arg2[%c0_4, %c0_5] : memref<16x128xf32, #tpu.memory_space<vmem>>, vector<16x128xf32>
    tpu.vector_store %arg2[%c0_4, %c0_5], %8 {strides = array<i32>} : memref<16x128xf32, #tpu.memory_space<vmem>>, vector<16x128xf32>,
    return
  }
  func.func @transform_0(%arg0: i32) -> (i32, i32) {
    %c0_i32 = arith.constant 0 : i32
    %c0_i32_0 = arith.constant 0 : i32
    return %arg0, %c0_i32 : i32, i32
  }
  func.func @transform_1(%arg0: i32) -> (i32, i32) {
    %c0_i32 = arith.constant 0 : i32
    %c0_i32_0 = arith.constant 0 : i32
    return %arg0, %c0_i32 : i32, i32
  }
}

</mosaic_0001>

<llo_original>
// kernel: tpu_custom_call.1
$region0: #{tpu_custom_call.1}
  #allocation0 [shape = 'u32[]', space=smem, size = 0x4, offset = 0x4, fixed_abs, tag = 'smem constant byte address 0x4 - core index']
  #allocation1 [shape = 'u32[144,128]{1,0:T(1,128)}', space=vmem, size = 0x12000, scoped, tag = 'internal scratch']
  %s0 = inlined_call_operand.hbm [shape: f32[16,128], index: 0, kind: input, shape index: {}]
  %s1 = inlined_call_operand.hbm [shape: f32[16,128], index: 1, kind: output, shape index: {}]
  %s2 = sld [smem:[#allocation0]]
  $region18: #{tpu_custom_call.1} parent=0
    _
  %s4 = ssub.s32 1, %s2
  %s5 = scalar_select 0, %s4, %s2
  $region1: #{tpu_custom_call.1} parent=0
    #allocation2 [shape = 'u8[8192]{0}', space=vmem, size = 0x2000, scoped, tag = 'input window, operand 0, single buffered']
    #allocation3 [shape = 's32[1]{0}', space=sflag, size = 0x4, scoped, tag = 'scoped memory for tpu_custom_call.1']
    #allocation4 [shape = 's32[1]{0}', space=sflag, size = 0x4, scoped, tag = 'scoped memory for tpu_custom_call.1']
    #allocation5 [shape = 'u8[8192]{0}', space=vmem, size = 0x2000, scoped, tag = 'output window, operand 0, single buffered']
    %6 = vsyncpa [#allocation3], 0
    %7 = vsyncpa [#allocation4], 0
    // Predicated region
    $region2: #{tpu_custom_call.1} parent=1 // pred_check
      _
    $region3: #{tpu_custom_call.1} parent=1 // pred_check_branch
      %9 = sbr.rel (0) target = $region5
    $region4: #{tpu_custom_call.1} parent=1 // pred_region
      %s11 = ssub.s32 256, 256
      %12 = vsyncadd [#allocation3], %s11
      %s13 = sshll.u32 [#allocation2], 4
      %s14 = int_to_ptr.vmem [resolvable:$true] %s13
      %19 = dma.hbm_to_vmem [thread:$0]  %s0, 256, %s14, [#allocation3], 128, 128, 8
    $region5: #{tpu_custom_call.1} parent=1 // pred_fallthru
      _
    // Predicated region
    $region6: #{tpu_custom_call.1} parent=1 // pred_check
      _
    $region7: #{tpu_custom_call.1} parent=1 // pred_check_branch
      %21 = sbr.rel (0) target = $region9
    $region8: #{tpu_custom_call.1} parent=1 // pred_region
      %22 = dma.done [#allocation3], 256
    $region9: #{tpu_custom_call.1} parent=1 // pred_fallthru
      _
    %v23 = vld [vmem:[#allocation2] sm:$0xff]
    %v24 = vld [vmem:[#allocation2 + $0x8] sm:$0xff]
    %v25 = vmul.f32 %v23, 127.5
    %v26 = vmul.f32 %v24, 127.5
    %v27 = vadd.f32 %v25, 128.0
    %v28 = vadd.f32 %v26, 128.0
    %v29 = vmax.f32 %v27, 0.0
    %v30 = vmax.f32 %v28, 0.0
    %v31 = vmin.f32 %v29, 255.0
    %v32 = vmin.f32 %v30, 255.0
    %33 = vst [vmem:[#allocation5] sm:$0xff] %v31
    %34 = vst [vmem:[#allocation5 + $0x8] sm:$0xff] %v32
    // Predicated region
    $region10: #{tpu_custom_call.1} parent=1 // pred_check
      _
    $region11: #{tpu_custom_call.1} parent=1 // pred_check_branch
      %36 = sbr.rel (0) target = $region13
    $region12: #{tpu_custom_call.1} parent=1 // pred_region
      %s38 = ssub.s32 256, 256
      %39 = vsyncadd [#allocation4], %s38
      %s40 = sshll.u32 [#allocation5], 4
      %s41 = int_to_ptr.vmem [resolvable:$true] %s40
      %46 = dma.vmem_to_hbm [thread:$0]  %s41, 256, %s1, [#allocation4], 128, 128, 8
    $region13: #{tpu_custom_call.1} parent=1 // pred_fallthru
      _
    // Predicated region
    $region14: #{tpu_custom_call.1} parent=1 // pred_check
      _
    $region15: #{tpu_custom_call.1} parent=1 // pred_check_branch
      %48 = sbr.rel (0) target = $region17
    $region16: #{tpu_custom_call.1} parent=1 // pred_region
      %49 = dma.done [#allocation4], 256
    $region17: #{tpu_custom_call.1} parent=1 // pred_fallthru
      _
    %50 = vsyncpa [#allocation3], 1
    %51 = vsyncpa [#allocation4], 1

</llo_original>
